<compile_context>
chip_gen: v7x
topology: tpu7x:2x2x1
jax: 0.10.0
libtpu: 0.0.40
codegen_flags: <defaults>
</compile_context>

<pallas_src>
import functools

import jax
import jax.numpy as jnp
from jax.experimental import pallas as pl
from jax.experimental.pallas import tpu as pltpu


def _fastspeech_loss_kernel(olens_ref, ilens_ref, d_outs_ref, ds_ref,
                            before_ref, after_ref, ys_ref,
                            l1_ref, dur_ref):
    tile = pl.program_id(0)

    # ---- masked L1 over this L-tile of the (B, Lmax, odim) mel tensors ----------
    before = before_ref[...].astype(jnp.float32)        # (B, TL, D)
    after = after_ref[...].astype(jnp.float32)           # (B, TL, D)
    ys = ys_ref[...].astype(jnp.float32)                 # (B, TL, D)
    b, tl, _ = before.shape

    # Reduce the feature axis first -> per-frame absolute error (B, TL), then mask frames.
    row_abs = jnp.sum(jnp.abs(before - ys) + jnp.abs(after - ys), axis=-1)
    frame_idx = tile * tl + jax.lax.broadcasted_iota(jnp.int32, (b, tl), 1)
    frame_mask = frame_idx < olens_ref[...]               # (B, TL) via (B, 1) broadcast
    # NOTE: fully-padded edge-tile rows (frame_idx >= Lmax >= olens) are always masked,
    # so partial edge blocks need no physical padding.
    l1_partial = jnp.sum(jnp.where(frame_mask, row_abs, 0.0))
    l1_ref[...] = jnp.broadcast_to(l1_partial, l1_ref.shape).astype(jnp.float32)

    # ---- duration-predictor loss: tiny, computed once on the first tile only ----
    dur_ref[...] = jnp.zeros_like(dur_ref)

    @pl.when(tile == 0)
    def _():
        d_outs = d_outs_ref[...].astype(jnp.float32)      # (B, T)
        ds = ds_ref[...].astype(jnp.float32)              # (B, T)
        bt, t = d_outs.shape
        tok_idx = jax.lax.broadcasted_iota(jnp.int32, (bt, t), 1)
        tok_mask = tok_idx < ilens_ref[...]                # (B, T) via (B, 1) broadcast
        err = d_outs - jnp.log(ds + 1.0)
        dur_partial = jnp.sum(jnp.where(tok_mask, err * err, 0.0))
        dur_ref[...] = jnp.broadcast_to(dur_partial, dur_ref.shape).astype(jnp.float32)


def _auto_tile(B, L, D, itemsize):
    """Biggest L-tile whose 3 double-buffered input streams fit a ~16 MiB VMEM budget."""
    budget = 16 * 1024 * 1024
    per_frame = 3 * 2 * B * D * itemsize     # 3 mel inputs, double-buffered
    tl = budget // max(per_frame, 1)
    tl = max(8, min(1024, tl))
    return (tl // 8) * 8                      # (8, 128) sublane rule on the L axis


@functools.partial(jax.jit, static_argnames=("tl",))
def feed_forward_transformer_loss(after_outs, before_outs, d_outs, ys, ds,
                                  ilens, olens, *, tl=None):
    """Returns (l1_loss, duration_loss) as float32 scalars."""
    B, L, D = ys.shape
    olens = olens.astype(jnp.int32)
    ilens = ilens.astype(jnp.int32)
    olens2 = olens.reshape(B, 1)
    ilens2 = ilens.reshape(B, 1)

    if tl is None:
        tl = _auto_tile(B, L, D, jnp.dtype(ys.dtype).itemsize)
    if L <= tl:
        tl_eff, num_l = L, 1                   # full extent, no (8,) constraint
    else:
        tl_eff, num_l = tl, -(-L // tl)        # edge tile handled by the frame mask

    l1_partials, dur_partials = pl.pallas_call(
        _fastspeech_loss_kernel,
        out_shape=(jax.ShapeDtypeStruct((num_l, 8, 1), jnp.float32),
                   jax.ShapeDtypeStruct((num_l, 8, 1), jnp.float32)),
        grid=(num_l,),
        in_specs=[
            pl.BlockSpec((B, 1), lambda l: (0, 0)),              # olens (B, 1)
            pl.BlockSpec((B, 1), lambda l: (0, 0)),              # ilens (B, 1)
            pl.BlockSpec(d_outs.shape, lambda l: (0, 0)),        # d_outs (resident, fetched once)
            pl.BlockSpec(ds.shape, lambda l: (0, 0)),            # ds     (resident, fetched once)
            pl.BlockSpec((B, tl_eff, D), lambda l: (0, l, 0)),   # before_outs (streamed)
            pl.BlockSpec((B, tl_eff, D), lambda l: (0, l, 0)),   # after_outs  (streamed)
            pl.BlockSpec((B, tl_eff, D), lambda l: (0, l, 0)),   # ys          (streamed)
        ],
        out_specs=(pl.BlockSpec((1, 8, 1), lambda l: (l, 0, 0)),
                   pl.BlockSpec((1, 8, 1), lambda l: (l, 0, 0))),
        compiler_params=pltpu.CompilerParams(
            dimension_semantics=("parallel",)),
    )(olens2, ilens2, d_outs, ds, before_outs, after_outs, ys)

    # Exact masked-element counts from the length vectors (integer math, no mask sums).
    out_count = (jnp.sum(olens) * D).astype(jnp.float32)
    dur_count = jnp.sum(ilens).astype(jnp.float32)

    # torch: l1 = mean(|before-ys|) + mean(|after-ys|), both over the same N frames.
    l1_loss = jnp.sum(l1_partials[:, 0, 0]) / out_count
    duration_loss = jnp.sum(dur_partials[:, 0, 0]) / dur_count
    return l1_loss, duration_loss


def _reference(after_outs, before_outs, d_outs, ys, ds, ilens, olens):
    """Pure-JAX reference mirroring the PyTorch forward (use_masking=True)."""
    B, L, D = ys.shape
    T = ds.shape[1]
    out_mask = (jnp.arange(L)[None, :] < olens[:, None])[..., None]        # (B, L, 1)
    out_mask3 = jnp.broadcast_to(out_mask, (B, L, D))
    n_out = jnp.sum(out_mask3)
    l1 = jnp.sum(jnp.where(out_mask3, jnp.abs(before_outs - ys), 0.0)) / n_out
    l1 = l1 + jnp.sum(jnp.where(out_mask3, jnp.abs(after_outs - ys), 0.0)) / n_out
    dur_mask = jnp.arange(T)[None, :] < ilens[:, None]                     # (B, T)
    n_dur = jnp.sum(dur_mask)
    tgt = jnp.log(ds.astype(jnp.float32) + 1.0)
    dur = jnp.sum(jnp.where(dur_mask, (d_outs - tgt) ** 2, 0.0)) / n_dur
    return l1, dur


if __name__ == "__main__":
    key = jax.random.PRNGKey(0)
    B, Lmax, odim, Tmax = 2, 16, 32, 8

    k1, k2, k3, k4, k5 = jax.random.split(key, 5)
    ys = jax.random.normal(k1, (B, Lmax, odim), dtype=jnp.float32)
    before_outs = jax.random.normal(k2, (B, Lmax, odim), dtype=jnp.float32)
    after_outs = before_outs + 0.1 * jax.random.normal(k3, (B, Lmax, odim), dtype=jnp.float32)
    d_outs = jax.random.normal(k4, (B, Tmax), dtype=jnp.float32)
    ds = jax.random.randint(k5, (B, Tmax), 0, 6).astype(jnp.float32)
    ilens = jnp.array([8, 6], dtype=jnp.int32)
    olens = jnp.array([16, 12], dtype=jnp.int32)

    l1_ref, dur_ref = _reference(after_outs, before_outs, d_outs, ys, ds, ilens, olens)

    # 1) tiled path: tl=8 -> two L-tiles, exercises the grid, per-tile partials and the
    #    tile-0-only duration branch.
    l1_a, dur_a = feed_forward_transformer_loss(
        after_outs, before_outs, d_outs, ys, ds, ilens, olens, tl=8)
    jax.block_until_ready((l1_a, dur_a))
    assert jnp.allclose(l1_a, l1_ref, rtol=1e-5, atol=1e-5), (l1_a, l1_ref)
    assert jnp.allclose(dur_a, dur_ref, rtol=1e-5, atol=1e-5), (dur_a, dur_ref)

    # 2) default path: auto tile -> single full-extent L-tile.
    l1_b, dur_b = feed_forward_transformer_loss(
        after_outs, before_outs, d_outs, ys, ds, ilens, olens)
    jax.block_until_ready((l1_b, dur_b))
    assert jnp.allclose(l1_b, l1_ref, rtol=1e-5, atol=1e-5), (l1_b, l1_ref)
    assert jnp.allclose(dur_b, dur_ref, rtol=1e-5, atol=1e-5), (dur_b, dur_ref)

    print("KERNEL_OK")
</pallas_src>

<mosaic_0001>
module attributes {stable_mosaic.version = 11 : i64} {
  func.func @_fastspeech_loss_kernel(%arg0: i32, %arg1: memref<2x1xi32, #tpu.memory_space<vmem>>, %arg2: memref<2x1xi32, #tpu.memory_space<vmem>>, %arg3: memref<2x8xf32, #tpu.memory_space<vmem>>, %arg4: memref<2x8xf32, #tpu.memory_space<vmem>>, %arg5: memref<2x8x32xf32, #tpu.memory_space<vmem>>, %arg6: memref<2x8x32xf32, #tpu.memory_space<vmem>>, %arg7: memref<2x8x32xf32, #tpu.memory_space<vmem>>, %arg8: memref<1x8x1xf32, #tpu.memory_space<vmem>>, %arg9: memref<1x8x1xf32, #tpu.memory_space<vmem>>) attributes {dimension_semantics = [#tpu.dimension_semantics<parallel>], iteration_bounds = array<i64: 2>, scalar_prefetch = 0 : i64, scratch_operands = 0 : i64, tpu.core_type = #tpu.core_type<tc>, window_params = [{pipeline_mode = #tpu.pipeline_mode<synchronous>, transform_indices = @transform_0, window_bounds = array<i64: 2, 1>}, {pipeline_mode = #tpu.pipeline_mode<synchronous>, transform_indices = @transform_1, window_bounds = array<i64: 2, 1>}, {pipeline_mode = #tpu.pipeline_mode<synchronous>, transform_indices = @transform_2, window_bounds = array<i64: 2, 8>}, {pipeline_mode = #tpu.pipeline_mode<synchronous>, transform_indices = @transform_3, window_bounds = array<i64: 2, 8>}, {transform_indices = @transform_4, window_bounds = array<i64: 2, 8, 32>}, {transform_indices = @transform_5, window_bounds = array<i64: 2, 8, 32>}, {transform_indices = @transform_6, window_bounds = array<i64: 2, 8, 32>}, {transform_indices = @transform_7, window_bounds = array<i64: 1, 8, 1>}, {transform_indices = @transform_8, window_bounds = array<i64: 1, 8, 1>}]} {
    %c0 = arith.constant 0 : index
    %c0_0 = arith.constant 0 : index
    %c0_1 = arith.constant 0 : index
    %0 = vector.load %arg5[%c0, %c0_0, %c0_1] : memref<2x8x32xf32, #tpu.memory_space<vmem>>, vector<2x8x32xf32>
    %c0_2 = arith.constant 0 : index
    %c0_3 = arith.constant 0 : index
    %c0_4 = arith.constant 0 : index
    %1 = vector.load %arg6[%c0_2, %c0_3, %c0_4] : memref<2x8x32xf32, #tpu.memory_space<vmem>>, vector<2x8x32xf32>
    %c0_5 = arith.constant 0 : index
    %c0_6 = arith.constant 0 : index
    %c0_7 = arith.constant 0 : index
    %2 = vector.load %arg7[%c0_5, %c0_6, %c0_7] : memref<2x8x32xf32, #tpu.memory_space<vmem>>, vector<2x8x32xf32>
    %3 = arith.subf %0, %2 : vector<2x8x32xf32>
    %4 = math.absf %3 : vector<2x8x32xf32>
    %5 = arith.subf %1, %2 : vector<2x8x32xf32>
    %6 = math.absf %5 : vector<2x8x32xf32>
    %7 = arith.addf %4, %6 : vector<2x8x32xf32>
    %cst = arith.constant dense<0.000000e+00> : vector<2x8xf32>
    %8 = vector.multi_reduction <add>, %7, %cst [2] : vector<2x8x32xf32> to vector<2x8xf32>
    %c8_i32 = arith.constant 8 : i32
    %9 = arith.muli %arg0, %c8_i32 : i32
    %10 = tpu.iota {dimensions = array<i32: 1>} : vector<2x8xi32>
    %11 = vector.broadcast %9 : i32 to vector<2x8xi32>
    %12 = arith.addi %11, %10 : vector<2x8xi32>
    %c0_8 = arith.constant 0 : index
    %c0_9 = arith.constant 0 : index
    %13 = vector.load %arg1[%c0_8, %c0_9] : memref<2x1xi32, #tpu.memory_space<vmem>>, vector<2x1xi32>
    %14 = vector.broadcast %13 : vector<2x1xi32> to vector<2x8xi32>
    %15 = arith.cmpi slt, %12, %14 : vector<2x8xi32>
    %cst_10 = arith.constant 0.000000e+00 : f32
    %16 = vector.broadcast %cst_10 : f32 to vector<2x8xf32>
    %17 = arith.select %15, %8, %16 : vector<2x8xi1>, vector<2x8xf32>
    %18 = vector.shape_cast %17 : vector<2x8xf32> to vector<1x2x8xf32>
    %cst_11 = arith.constant dense<0.000000e+00> : vector<1xf32>
    %19 = vector.multi_reduction <add>, %18, %cst_11 [1, 2] : vector<1x2x8xf32> to vector<1xf32>
    %20 = vector.shape_cast %19 : vector<1xf32> to vector<1x1x1xf32>
    %21 = vector.extract %20[0, 0, 0] : f32 from vector<1x1x1xf32>
    %22 = vector.broadcast %21 : f32 to vector<1x8x1xf32>
    %c0_12 = arith.constant 0 : index
    %c0_13 = arith.constant 0 : index
    %c0_14 = arith.constant 0 : index
    %23 = vector.load %arg8[%c0_12, %c0_13, %c0_14] : memref<1x8x1xf32, #tpu.memory_space<vmem>>, vector<1x8x1xf32>
    tpu.vector_store %arg8[%c0_12, %c0_13, %c0_14], %22 {strides = array<i32>} : memref<1x8x1xf32, #tpu.memory_space<vmem>>, vector<1x8x1xf32>,
    %cst_15 = arith.constant 0.000000e+00 : f32
    %24 = vector.broadcast %cst_15 : f32 to vector<1x8x1xf32>
    %c0_16 = arith.constant 0 : index
    %c0_17 = arith.constant 0 : index
    %c0_18 = arith.constant 0 : index
    %25 = vector.load %arg9[%c0_16, %c0_17, %c0_18] : memref<1x8x1xf32, #tpu.memory_space<vmem>>, vector<1x8x1xf32>
    tpu.vector_store %arg9[%c0_16, %c0_17, %c0_18], %24 {strides = array<i32>} : memref<1x8x1xf32, #tpu.memory_space<vmem>>, vector<1x8x1xf32>,
    %c0_i32 = arith.constant 0 : i32
    %26 = arith.cmpi eq, %arg0, %c0_i32 : i32
    %27 = arith.extui %26 : i1 to i32
    %c0_i32_19 = arith.constant 0 : i32
    %28 = arith.cmpi ne, %27, %c0_i32_19 : i32
    scf.if %28 {
      %c0_20 = arith.constant 0 : index
      %c0_21 = arith.constant 0 : index
      %29 = vector.load %arg3[%c0_20, %c0_21] : memref<2x8xf32, #tpu.memory_space<vmem>>, vector<2x8xf32>
      %c0_22 = arith.constant 0 : index
      %c0_23 = arith.constant 0 : index
      %30 = vector.load %arg4[%c0_22, %c0_23] : memref<2x8xf32, #tpu.memory_space<vmem>>, vector<2x8xf32>
      %31 = tpu.iota {dimensions = array<i32: 1>} : vector<2x8xi32>
      %c0_24 = arith.constant 0 : index
      %c0_25 = arith.constant 0 : index
      %32 = vector.load %arg2[%c0_24, %c0_25] : memref<2x1xi32, #tpu.memory_space<vmem>>, vector<2x1xi32>
      %33 = vector.broadcast %32 : vector<2x1xi32> to vector<2x8xi32>
      %34 = arith.cmpi slt, %31, %33 : vector<2x8xi32>
      %cst_26 = arith.constant 1.000000e+00 : f32
      %35 = vector.broadcast %cst_26 : f32 to vector<2x8xf32>
      %36 = arith.addf %30, %35 : vector<2x8xf32>
      %37 = math.log %36 : vector<2x8xf32>
      %38 = arith.subf %29, %37 : vector<2x8xf32>
      %39 = arith.mulf %38, %38 : vector<2x8xf32>
      %cst_27 = arith.constant 0.000000e+00 : f32
      %40 = vector.broadcast %cst_27 : f32 to vector<2x8xf32>
      %41 = arith.select %34, %39, %40 : vector<2x8xi1>, vector<2x8xf32>
      %42 = vector.shape_cast %41 : vector<2x8xf32> to vector<1x2x8xf32>
      %cst_28 = arith.constant dense<0.000000e+00> : vector<1xf32>
      %43 = vector.multi_reduction <add>, %42, %cst_28 [1, 2] : vector<1x2x8xf32> to vector<1xf32>
      %44 = vector.shape_cast %43 : vector<1xf32> to vector<1x1x1xf32>
      %45 = vector.extract %44[0, 0, 0] : f32 from vector<1x1x1xf32>
      %46 = vector.broadcast %45 : f32 to vector<1x8x1xf32>
      %c0_29 = arith.constant 0 : index
      %c0_30 = arith.constant 0 : index
      %c0_31 = arith.constant 0 : index
      %47 = vector.load %arg9[%c0_29, %c0_30, %c0_31] : memref<1x8x1xf32, #tpu.memory_space<vmem>>, vector<1x8x1xf32>
      tpu.vector_store %arg9[%c0_29, %c0_30, %c0_31], %46 {strides = array<i32>} : memref<1x8x1xf32, #tpu.memory_space<vmem>>, vector<1x8x1xf32>,
    } else {
    }
    return
  }
  func.func @transform_0(%arg0: i32) -> (i32, i32) {
    %c0_i32 = arith.constant 0 : i32
    %c0_i32_0 = arith.constant 0 : i32
    %c0_i32_1 = arith.constant 0 : i32
    return %c0_i32, %c0_i32_0 : i32, i32
  }
  func.func @transform_1(%arg0: i32) -> (i32, i32) {
    %c0_i32 = arith.constant 0 : i32
    %c0_i32_0 = arith.constant 0 : i32
    %c0_i32_1 = arith.constant 0 : i32
    return %c0_i32, %c0_i32_0 : i32, i32
  }
  func.func @transform_2(%arg0: i32) -> (i32, i32) {
    %c0_i32 = arith.constant 0 : i32
    %c0_i32_0 = arith.constant 0 : i32
    %c0_i32_1 = arith.constant 0 : i32
    return %c0_i32, %c0_i32_0 : i32, i32
  }
  func.func @transform_3(%arg0: i32) -> (i32, i32) {
    %c0_i32 = arith.constant 0 : i32
    %c0_i32_0 = arith.constant 0 : i32
    %c0_i32_1 = arith.constant 0 : i32
    return %c0_i32, %c0_i32_0 : i32, i32
  }
  func.func @transform_4(%arg0: i32) -> (i32, i32, i32) {
    %c0_i32 = arith.constant 0 : i32
    %c0_i32_0 = arith.constant 0 : i32
    %c0_i32_1 = arith.constant 0 : i32
    return %c0_i32, %arg0, %c0_i32_0 : i32, i32, i32
  }
  func.func @transform_5(%arg0: i32) -> (i32, i32, i32) {
    %c0_i32 = arith.constant 0 : i32
    %c0_i32_0 = arith.constant 0 : i32
    %c0_i32_1 = arith.constant 0 : i32
    return %c0_i32, %arg0, %c0_i32_0 : i32, i32, i32
  }
  func.func @transform_6(%arg0: i32) -> (i32, i32, i32) {
    %c0_i32 = arith.constant 0 : i32
    %c0_i32_0 = arith.constant 0 : i32
    %c0_i32_1 = arith.constant 0 : i32
    return %c0_i32, %arg0, %c0_i32_0 : i32, i32, i32
  }
  func.func @transform_7(%arg0: i32) -> (i32, i32, i32) {
    %c0_i32 = arith.constant 0 : i32
    %c0_i32_0 = arith.constant 0 : i32
    %c0_i32_1 = arith.constant 0 : i32
    return %arg0, %c0_i32, %c0_i32_0 : i32, i32, i32
  }
  func.func @transform_8(%arg0: i32) -> (i32, i32, i32) {
    %c0_i32 = arith.constant 0 : i32
    %c0_i32_0 = arith.constant 0 : i32
    %c0_i32_1 = arith.constant 0 : i32
    return %arg0, %c0_i32, %c0_i32_0 : i32, i32, i32
  }
}

</mosaic_0001>

<llo_original>
// kernel: feed_forward_transformer_loss.1
$region0: #{feed_forward_transformer_loss.1}
  #allocation0 [shape = 'u32[]', space=smem, size = 0x4, offset = 0x4, fixed_abs, tag = 'smem constant byte address 0x4 - core index']
  #allocation1 [shape = 'u32[144,128]{1,0:T(1,128)}', space=vmem, size = 0x12000, scoped, tag = 'internal scratch']
  %s0 = inlined_call_operand.vmem [shape: s32[2,1], index: 0, kind: input, shape index: {}]
  %s1 = inlined_call_operand.vmem [shape: s32[2,1], index: 1, kind: input, shape index: {}]
  %s2 = inlined_call_operand.vmem [shape: f32[2,8], index: 2, kind: input, shape index: {}]
  %s3 = inlined_call_operand.vmem [shape: f32[2,8], index: 3, kind: input, shape index: {}]
  %s4 = inlined_call_operand.hbm [shape: f32[2,16,32], index: 4, kind: input, shape index: {}]
  %s5 = inlined_call_operand.hbm [shape: f32[2,16,32], index: 5, kind: input, shape index: {}]
  %s6 = inlined_call_operand.hbm [shape: f32[2,16,32], index: 6, kind: input, shape index: {}]
  %s7 = inlined_call_operand.vmem [shape: f32[2,8,1], index: 7, kind: output, shape index: {0}]
  %s8 = inlined_call_operand.vmem [shape: f32[2,8,1], index: 8, kind: output, shape index: {1}]
  %9 = xla_tuple %s7, %s8
  %s10 = sld [smem:[#allocation0]]
  $region85: #{feed_forward_transformer_loss.1} parent=0
    _
  %s12 = ssub.s32 1, %s10
  %s13 = scalar_select 0, %s12, %s10
  $region1: #{feed_forward_transformer_loss.1} parent=0
    #allocation2 [shape = 'u8[16384]{0}', space=vmem, size = 0x4000, scoped, tag = 'input window, operand 4']
    #allocation3 [shape = 's32[2]{0}', space=sflag, size = 0x8, scoped, tag = 'scoped memory for feed_forward_transformer_loss.1']
    #allocation4 [shape = 'u8[16384]{0}', space=vmem, size = 0x4000, scoped, tag = 'input window, operand 5']
    #allocation5 [shape = 's32[2]{0}', space=sflag, size = 0x8, scoped, tag = 'scoped memory for feed_forward_transformer_loss.1']
    #allocation6 [shape = 'u8[16384]{0}', space=vmem, size = 0x4000, scoped, tag = 'input window, operand 6']
    %14 = vsyncpa [#allocation3], 0
    %s15 = scalar_lea.sflag [#allocation3], 1
    %16 = vsyncpa %s15, 0
    %17 = vsyncpa [#allocation5], 0
    %s18 = scalar_lea.sflag [#allocation5], 1
    %19 = vsyncpa %s18, 0
    loop: start=0, step=1, limit=4
    $region2: #{feed_forward_transformer_loss.1} parent=1 // loop_pre_header
      _
    $region3: #{feed_forward_transformer_loss.1} parent=1 // loop_header
      %s21 = sphi 0, %s25
      %p22 = scmp.ge.s32.totalorder %s21, 4
      %s29 = sphi 0, %s29
      %s31 = sphi 0, %s29
      %s32 = sphi 0, %s31
      %s46 = sphi 0, %s32
      %s50 = sphi 0, %s50
      %s52 = sphi 0, %s50
      %s53 = sphi 0, %s52
      %s67 = sphi 0, %s53
      %s71 = sphi 0, %s71
      %s73 = sphi 0, %s71
      %s74 = sphi 0, %s73
      %s88 = sphi 0, %s74
      %s92 = sphi 0, %s92
      %s94 = sphi 0, %s92
      %s95 = sphi 0, %s94
      %s109 = sphi 0, %s95
      %s115 = sphi 0, %s117
      %s118 = sphi 0, %s115
      %s119 = sphi 0, %s118
      %s135 = sphi 0, %s119
      %s141 = sphi 0, %s143
      %s144 = sphi 0, %s141
      %s145 = sphi 0, %s144
      %s161 = sphi 0, %s145
      %s167 = sphi 0, %s169
      %s170 = sphi 0, %s167
      %s171 = sphi 0, %s170
      %s187 = sphi 0, %s171
      %s193 = sphi 0, %s195
      %s196 = sphi 0, %s193
      %s197 = sphi 0, %s196
      %s213 = sphi 0, %s197
      %s219 = sphi 0, %s221
      %s222 = sphi 0, %s219
      %s223 = sphi 0, %s222
      %s239 = sphi 0, %s223
    $region4: #{feed_forward_transformer_loss.1} parent=1 // loop_header_branch
      %24 = sbr.rel (%p22) target = $region8
    $region5: #{feed_forward_transformer_loss.1} parent=1 // loop_body
      %s26 = ssub.s32 %s21, 1
      %s27 = ssub.s32 %s21, 2
      %s28 = sadd.s32 %s21, 1
      %s30 = sadd.s32 %s29, 1
      %p33 = scmp.eq.s32.totalorder %s21, 1
      %p34 = scmp.ne.s32.totalorder %s29, %s31
      %p35 = scmp.eq.s32.totalorder %s21, 0
      %p36 = por %p34, %p35
      %p37 = scmp.ne.s32.totalorder %s29, %s31
      %p38 = scmp.eq.s32.totalorder %s26, 1
      %p39 = por %p37, %p38
      %p40 = scmp.ne.s32.totalorder %s31, %s32
      %p41 = scmp.eq.s32.totalorder %s26, 0
      %p42 = por %p40, %p41
      %p43 = scmp.ne.s32.totalorder %s31, %s32
      %p44 = scmp.eq.s32.totalorder %s27, 1
      %p45 = por %p43, %p44
      %p47 = scmp.ne.s32.totalorder %s32, %s46
      %p48 = scmp.eq.s32.totalorder %s27, 0
      %p49 = por %p47, %p48
      %s51 = sadd.s32 %s50, 1
      %p54 = scmp.eq.s32.totalorder %s21, 1
      %p55 = scmp.ne.s32.totalorder %s50, %s52
      %p56 = scmp.eq.s32.totalorder %s21, 0
      %p57 = por %p55, %p56
      %p58 = scmp.ne.s32.totalorder %s50, %s52
      %p59 = scmp.eq.s32.totalorder %s26, 1
      %p60 = por %p58, %p59
      %p61 = scmp.ne.s32.totalorder %s52, %s53
      %p62 = scmp.eq.s32.totalorder %s26, 0
      %p63 = por %p61, %p62
      %p64 = scmp.ne.s32.totalorder %s52, %s53
      %p65 = scmp.eq.s32.totalorder %s27, 1
      %p66 = por %p64, %p65
      %p68 = scmp.ne.s32.totalorder %s53, %s67
      %p69 = scmp.eq.s32.totalorder %s27, 0
      %p70 = por %p68, %p69
      %s72 = sadd.s32 %s71, 1
      %p75 = scmp.eq.s32.totalorder %s21, 1
      %p76 = scmp.ne.s32.totalorder %s71, %s73
      %p77 = scmp.eq.s32.totalorder %s21, 0
      %p78 = por %p76, %p77
      %p79 = scmp.ne.s32.totalorder %s71, %s73
      %p80 = scmp.eq.s32.totalorder %s26, 1
      %p81 = por %p79, %p80
      %p82 = scmp.ne.s32.totalorder %s73, %s74
      %p83 = scmp.eq.s32.totalorder %s26, 0
      %p84 = por %p82, %p83
      %p85 = scmp.ne.s32.totalorder %s73, %s74
      %p86 = scmp.eq.s32.totalorder %s27, 1
      %p87 = por %p85, %p86
      %p89 = scmp.ne.s32.totalorder %s74, %s88
      %p90 = scmp.eq.s32.totalorder %s27, 0
      %p91 = por %p89, %p90
      %s93 = sadd.s32 %s92, 1
      %p96 = scmp.eq.s32.totalorder %s21, 1
      %p97 = scmp.ne.s32.totalorder %s92, %s94
      %p98 = scmp.eq.s32.totalorder %s21, 0
      %p99 = por %p97, %p98
      %p100 = scmp.ne.s32.totalorder %s92, %s94
      %p101 = scmp.eq.s32.totalorder %s26, 1
      %p102 = por %p100, %p101
      %p103 = scmp.ne.s32.totalorder %s94, %s95
      %p104 = scmp.eq.s32.totalorder %s26, 0
      %p105 = por %p103, %p104
      %p106 = scmp.ne.s32.totalorder %s94, %s95
      %p107 = scmp.eq.s32.totalorder %s27, 1
      %p108 = por %p106, %p107
      %p110 = scmp.ne.s32.totalorder %s95, %s109
      %p111 = scmp.eq.s32.totalorder %s27, 0
      %p112 = por %p110, %p111
      %s113 = ssub.s32 %s21, %s28
      %p114 = scmp.eq.s32.totalorder %s113, 0
      %s116 = sadd.s32 %s115, 1
      %s117 = scalar_select %p114, %s115, %s116
      %p120 = pneg %p114
      %p121 = scmp.eq.s32.totalorder %s21, 1
      %p122 = por %p120, %p121
      %p123 = scmp.ne.s32.totalorder %s115, %s118
      %p124 = scmp.eq.s32.totalorder %s21, 0
      %p125 = por %p123, %p124
      %p126 = scmp.ne.s32.totalorder %s115, %s118
      %p127 = scmp.eq.s32.totalorder %s26, 1
      %p128 = por %p126, %p127
      %p129 = scmp.ne.s32.totalorder %s118, %s119
      %p130 = scmp.eq.s32.totalorder %s26, 0
      %p131 = por %p129, %p130
      %p132 = scmp.ne.s32.totalorder %s118, %s119
      %p133 = scmp.eq.s32.totalorder %s27, 1
      %p134 = por %p132, %p133
      %p136 = scmp.ne.s32.totalorder %s119, %s135
      %p137 = scmp.eq.s32.totalorder %s27, 0
      %p138 = por %p136, %p137
      %s139 = ssub.s32 %s21, %s28
      %p140 = scmp.eq.s32.totalorder %s139, 0
      %s142 = sadd.s32 %s141, 1
      %s143 = scalar_select %p140, %s141, %s142
      %p146 = pneg %p140
      %p147 = scmp.eq.s32.totalorder %s21, 1
      %p148 = por %p146, %p147
      %p149 = scmp.ne.s32.totalorder %s141, %s144
      %p150 = scmp.eq.s32.totalorder %s21, 0
      %p151 = por %p149, %p150
      %p152 = scmp.ne.s32.totalorder %s141, %s144
      %p153 = scmp.eq.s32.totalorder %s26, 1
      %p154 = por %p152, %p153
      %p155 = scmp.ne.s32.totalorder %s144, %s145
      %p156 = scmp.eq.s32.totalorder %s26, 0
      %p157 = por %p155, %p156
      %p158 = scmp.ne.s32.totalorder %s144, %s145
      %p159 = scmp.eq.s32.totalorder %s27, 1
      %p160 = por %p158, %p159
      %p162 = scmp.ne.s32.totalorder %s145, %s161
      %p163 = scmp.eq.s32.totalorder %s27, 0
      %p164 = por %p162, %p163
      %s165 = ssub.s32 %s21, %s28
      %p166 = scmp.eq.s32.totalorder %s165, 0
      %s168 = sadd.s32 %s167, 1
      %s169 = scalar_select %p166, %s167, %s168
      %p172 = pneg %p166
      %p173 = scmp.eq.s32.totalorder %s21, 1
      %p174 = por %p172, %p173
      %p175 = scmp.ne.s32.totalorder %s167, %s170
      %p176 = scmp.eq.s32.totalorder %s21, 0
      %p177 = por %p175, %p176
      %p178 = scmp.ne.s32.totalorder %s167, %s170
      %p179 = scmp.eq.s32.totalorder %s26, 1
      %p180 = por %p178, %p179
      %p181 = scmp.ne.s32.totalorder %s170, %s171
      %p182 = scmp.eq.s32.totalorder %s26, 0
      %p183 = por %p181, %p182
      %p184 = scmp.ne.s32.totalorder %s170, %s171
      %p185 = scmp.eq.s32.totalorder %s27, 1
      %p186 = por %p184, %p185
      %p188 = scmp.ne.s32.totalorder %s171, %s187
      %p189 = scmp.eq.s32.totalorder %s27, 0
      %p190 = por %p188, %p189
      %s191 = ssub.s32 %s21, %s28
      %p192 = scmp.eq.s32.totalorder %s191, 0
      %s194 = sadd.s32 %s193, 1
      %s195 = scalar_select %p192, %s193, %s194
      %p198 = pneg %p192
      %p199 = scmp.eq.s32.totalorder %s21, 1
      %p200 = por %p198, %p199
      %p201 = scmp.ne.s32.totalorder %s193, %s196
      %p202 = scmp.eq.s32.totalorder %s21, 0
      %p203 = por %p201, %p202
      %p204 = scmp.ne.s32.totalorder %s193, %s196
      %p205 = scmp.eq.s32.totalorder %s26, 1
      %p206 = por %p204, %p205
      %p207 = scmp.ne.s32.totalorder %s196, %s197
      %p208 = scmp.eq.s32.totalorder %s26, 0
      %p209 = por %p207, %p208
      %p210 = scmp.ne.s32.totalorder %s196, %s197
      %p211 = scmp.eq.s32.totalorder %s27, 1
      %p212 = por %p210, %p211
      %p214 = scmp.ne.s32.totalorder %s197, %s213
      %p215 = scmp.eq.s32.totalorder %s27, 0
      %p216 = por %p214, %p215
      %s217 = ssub.s32 %s21, %s28
      %p218 = scmp.eq.s32.totalorder %s217, 0
      %s220 = sadd.s32 %s219, 1
      %s221 = scalar_select %p218, %s219, %s220
      %p224 = pneg %p218
      %p225 = scmp.eq.s32.totalorder %s21, 1
      %p226 = por %p224, %p225
      %p227 = scmp.ne.s32.totalorder %s219, %s222
      %p228 = scmp.eq.s32.totalorder %s21, 0
      %p229 = por %p227, %p228
      %p230 = scmp.ne.s32.totalorder %s219, %s222
      %p231 = scmp.eq.s32.totalorder %s26, 1
      %p232 = por %p230, %p231
      %p233 = scmp.ne.s32.totalorder %s222, %s223
      %p234 = scmp.eq.s32.totalorder %s26, 0
      %p235 = por %p233, %p234
      %p236 = scmp.ne.s32.totalorder %s222, %s223
      %p237 = scmp.eq.s32.totalorder %s27, 1
      %p238 = por %p236, %p237
      %p240 = scmp.ne.s32.totalorder %s223, %s239
      %p241 = scmp.eq.s32.totalorder %s27, 0
      %p242 = por %p240, %p241
      %p243 = scmp.le.s32.totalorder 1, %s21
      %p244 = scmp.lt.s32.totalorder %s21, 3
      %p245 = pnand %p243, %p244
      %p246 = pneg %p245
      // Predicated region
      $region9: #{feed_forward_transformer_loss.1} parent=5 // pred_check
        _
      $region10: #{feed_forward_transformer_loss.1} parent=5 // pred_check_branch
        %248 = sbr.rel (%p245) target = $region12
      $region11: #{feed_forward_transformer_loss.1} parent=5 // pred_region
        %s249 = ssub.s32 %s21, 1
        // Predicated region
        $region13: #{feed_forward_transformer_loss.1} parent=11 // pred_check
          %p250 = pneg %p42
        $region14: #{feed_forward_transformer_loss.1} parent=11 // pred_check_branch
          %252 = sbr.rel (%p250) target = $region16
        $region15: #{feed_forward_transformer_loss.1} parent=11 // pred_region
          _
        $region16: #{feed_forward_transformer_loss.1} parent=11 // pred_fallthru
          _
        // Predicated region
        $region17: #{feed_forward_transformer_loss.1} parent=11 // pred_check
          %p253 = pneg %p63
        $region18: #{feed_forward_transformer_loss.1} parent=11 // pred_check_branch
          %255 = sbr.rel (%p253) target = $region20
        $region19: #{feed_forward_transformer_loss.1} parent=11 // pred_region
          _
        $region20: #{feed_forward_transformer_loss.1} parent=11 // pred_fallthru
          _
        // Predicated region
        $region21: #{feed_forward_transformer_loss.1} parent=11 // pred_check
          %p256 = pneg %p84
        $region22: #{feed_forward_transformer_loss.1} parent=11 // pred_check_branch
          %258 = sbr.rel (%p256) target = $region24
        $region23: #{feed_forward_transformer_loss.1} parent=11 // pred_region
          _
        $region24: #{feed_forward_transformer_loss.1} parent=11 // pred_fallthru
          _
        // Predicated region
        $region25: #{feed_forward_transformer_loss.1} parent=11 // pred_check
          %p259 = pneg %p105
        $region26: #{feed_forward_transformer_loss.1} parent=11 // pred_check_branch
          %261 = sbr.rel (%p259) target = $region28
        $region27: #{feed_forward_transformer_loss.1} parent=11 // pred_region
          _
        $region28: #{feed_forward_transformer_loss.1} parent=11 // pred_fallthru
          _
      $region12: #{feed_forward_transformer_loss.1} parent=5 // pred_fallthru
        _
      %p262 = scmp.lt.s32.totalorder %s21, 2
      // Predicated region
      $region29: #{feed_forward_transformer_loss.1} parent=5 // pred_check
        %p263 = pneg %p262
      $region30: #{feed_forward_transformer_loss.1} parent=5 // pred_check_branch
        %265 = sbr.rel (%p263) target = $region32
      $region31: #{feed_forward_transformer_loss.1} parent=5 // pred_region
        // Predicated region
        $region33: #{feed_forward_transformer_loss.1} parent=31 // pred_check
          %p266 = pneg %p125
        $region34: #{feed_forward_transformer_loss.1} parent=31 // pred_check_branch
          %268 = sbr.rel (%p266) target = $region36
        $region35: #{feed_forward_transformer_loss.1} parent=31 // pred_region
          %s269 = sand.u32 %s115, 1
          %s270 = scalar_lea.sflag [#allocation3], %s269
          %s271 = sand.u32 %s115, 1
          %s272 = smul.addr %s271, 16
          %s273 = scalar_lea.vmem [#allocation2], %s272
          %s275 = ssub.s32 256, 256
          %276 = vsyncadd %s270, %s275
          %s277 = smul.addr %s21, 128
          %s278 = scalar_lea.hbm %s4, %s277
          %s279 = sshll.u32 %s273, 4
          %s280 = int_to_ptr.vmem [resolvable:$true] %s279
          %285 = dma.hbm_to_vmem [thread:$0]  %s278, 256, %s280, %s270, 256, 128, 8
        $region36: #{feed_forward_transformer_loss.1} parent=31 // pred_fallthru
          _
        // Predicated region
        $region37: #{feed_forward_transformer_loss.1} parent=31 // pred_check
          %p286 = pneg %p151
        $region38: #{feed_forward_transformer_loss.1} parent=31 // pred_check_branch
          %288 = sbr.rel (%p286) target = $region40
        $region39: #{feed_forward_transformer_loss.1} parent=31 // pred_region
          %s289 = sand.u32 %s21, 1
          %s290 = scalar_lea.sflag [#allocation5], %s289
          %s291 = sand.u32 %s141, 1
          %s292 = smul.addr %s291, 16
          %s293 = scalar_lea.vmem [#allocation4], %s292
          %s295 = ssub.s32 256, 256
          %296 = vsyncadd %s290, %s295
          %s297 = smul.addr %s21, 128
          %s298 = scalar_lea.hbm %s5, %s297
          %s299 = sshll.u32 %s293, 4
          %s300 = int_to_ptr.vmem [resolvable:$true] %s299
          %305 = dma.hbm_to_vmem [thread:$0]  %s298, 256, %s300, %s290, 256, 128, 8
        $region40: #{feed_forward_transformer_loss.1} parent=31 // pred_fallthru
          _
        // Predicated region
        $region41: #{feed_forward_transformer_loss.1} parent=31 // pred_check
          %p306 = pneg %p177
        $region42: #{feed_forward_transformer_loss.1} parent=31 // pred_check_branch
          %308 = sbr.rel (%p306) target = $region44
        $region43: #{feed_forward_transformer_loss.1} parent=31 // pred_region
          %s309 = sand.u32 %s21, 1
          %s310 = scalar_lea.sflag [#allocation5], %s309
          %s311 = sand.u32 %s167, 1
          %s312 = smul.addr %s311, 16
          %s313 = scalar_lea.vmem [#allocation6], %s312
          %s315 = ssub.s32 256, 256
          %316 = vsyncadd %s310, %s315
          %s317 = smul.addr %s21, 128
          %s318 = scalar_lea.hbm %s6, %s317
          %s319 = sshll.u32 %s313, 4
          %s320 = int_to_ptr.vmem [resolvable:$true] %s319
          %325 = dma.hbm_to_vmem [thread:$0]  %s318, 256, %s320, %s310, 256, 128, 8
        $region44: #{feed_forward_transformer_loss.1} parent=31 // pred_fallthru
          _
      $region32: #{feed_forward_transformer_loss.1} parent=5 // pred_fallthru
        _
      %p326 = scmp.le.s32.totalorder 1, %s21
      %p327 = scmp.lt.s32.totalorder %s21, 3
      %p328 = pnand %p326, %p327
      %p329 = pneg %p328
      // Predicated region
      $region45: #{feed_forward_transformer_loss.1} parent=5 // pred_check
        _
      $region46: #{feed_forward_transformer_loss.1} parent=5 // pred_check_branch
        %331 = sbr.rel (%p328) target = $region48
      $region47: #{feed_forward_transformer_loss.1} parent=5 // pred_region
        %s332 = ssub.s32 %s21, 1
        %s333 = sand.u32 %s118, 1
        %s334 = scalar_lea.sflag [#allocation3], %s333
        %s335 = sand.u32 %s118, 1
        %s336 = smul.addr %s335, 16
        %s337 = scalar_lea.vmem [#allocation2], %s336
        // Predicated region
        $region49: #{feed_forward_transformer_loss.1} parent=47 // pred_check
          %p338 = pneg %p131
        $region50: #{feed_forward_transformer_loss.1} parent=47 // pred_check_branch
          %340 = sbr.rel (%p338) target = $region52
        $region51: #{feed_forward_transformer_loss.1} parent=47 // pred_region
          %341 = dma.done %s334, 256
        $region52: #{feed_forward_transformer_loss.1} parent=47 // pred_fallthru
          _
        %s342 = sand.u32 %s26, 1
        %s343 = scalar_lea.sflag [#allocation5], %s342
        %s344 = sand.u32 %s144, 1
        %s345 = smul.addr %s344, 16
        %s346 = scalar_lea.vmem [#allocation4], %s345
        // Predicated region
        $region53: #{feed_forward_transformer_loss.1} parent=47 // pred_check
          %p347 = pneg %p157
        $region54: #{feed_forward_transformer_loss.1} parent=47 // pred_check_branch
          %349 = sbr.rel (%p347) target = $region56
        $region55: #{feed_forward_transformer_loss.1} parent=47 // pred_region
          %350 = dma.done %s343, 256
        $region56: #{feed_forward_transformer_loss.1} parent=47 // pred_fallthru
          _
        %s351 = sand.u32 %s26, 1
        %s352 = scalar_lea.sflag [#allocation5], %s351
        %s353 = sand.u32 %s170, 1
        %s354 = smul.addr %s353, 16
        %s355 = scalar_lea.vmem [#allocation6], %s354
        // Predicated region
        $region57: #{feed_forward_transformer_loss.1} parent=47 // pred_check
          %p356 = pneg %p183
        $region58: #{feed_forward_transformer_loss.1} parent=47 // pred_check_branch
          %358 = sbr.rel (%p356) target = $region60
        $region59: #{feed_forward_transformer_loss.1} parent=47 // pred_region
          %359 = dma.done %s352, 256
        $region60: #{feed_forward_transformer_loss.1} parent=47 // pred_fallthru
          _
        %p360 = pneg %p42
        %p361 = pneg %p39
        %p362 = pneg %p63
        %p363 = pneg %p60
        %p364 = pneg %p84
        %p365 = pneg %p81
        %p366 = pneg %p105
        %p367 = pneg %p102
        %s368 = sand.u32 %s118, 1
        %s369 = scalar_lea.sflag [#allocation3], %s368
        %s370 = sand.u32 %s118, 1
        %s371 = smul.addr %s370, 16
        %s372 = scalar_lea.vmem [#allocation2], %s371
        %p373 = pneg %p131
        %p374 = pneg %p128
        %s375 = sand.u32 %s26, 1
        %s376 = scalar_lea.sflag [#allocation5], %s375
        %s377 = sand.u32 %s144, 1
        %s378 = smul.addr %s377, 16
        %s379 = scalar_lea.vmem [#allocation4], %s378
        %p380 = pneg %p157
        %p381 = pneg %p154
        %s382 = sand.u32 %s26, 1
        %s383 = scalar_lea.sflag [#allocation5], %s382
        %s384 = sand.u32 %s170, 1
        %s385 = smul.addr %s384, 16
        %s386 = scalar_lea.vmem [#allocation6], %s385
        %p387 = pneg %p183
        %p388 = pneg %p180
        %p389 = pneg %p209
        %p390 = pneg %p206
        %p391 = scmp.lt.s32.totalorder %s26, 1
        %s392 = scalar_select %p391, %s26, 1
        %s393 = smul.addr %s392, 8
        %s394 = scalar_lea.vmem %s7, %s393
        %p395 = pneg %p235
        %p396 = pneg %p232
        %p397 = scmp.lt.s32.totalorder %s26, 1
        %s398 = scalar_select %p397, %s26, 1
        %s399 = smul.addr %s398, 8
        %s400 = scalar_lea.vmem %s8, %s399
        %p401 = scmp.lt.s32.totalorder %s26, 1
        %s402 = scalar_select %p401, %s26, 1
        %s403 = smul.addr %s402, 8
        %s404 = scalar_lea.vmem %s7, %s403
        %p405 = scmp.lt.s32.totalorder %s26, 1
        %s406 = scalar_select %p405, %s26, 1
        %s407 = smul.addr %s406, 8
        %s408 = scalar_lea.vmem %s8, %s407
        %v409 = vld [vmem:[%s337] sm:$0xff]
        %v410 = vld [vmem:[%s337 + $0x8] sm:$0xff]
        %v411 = vld [vmem:[%s346] sm:$0xff]
        %v412 = vld [vmem:[%s346 + $0x8] sm:$0xff]
        %v413 = vld [vmem:[%s355] sm:$0xff]
        %v414 = vld [vmem:[%s355 + $0x8] sm:$0xff]
        %v415 = vsub.f32 %v409, %v413
        %v416 = vsub.f32 %v410, %v414
        %v417 = vand.u32 2147483647, %v415
        %v418 = vand.u32 2147483647, %v416
        %v419 = vsub.f32 %v411, %v413
        %v420 = vsub.f32 %v412, %v414
        %v421 = vand.u32 2147483647, %v419
        %v422 = vand.u32 2147483647, %v420
        %v423 = vadd.f32 %v417, %v421
        %v424 = vadd.f32 %v418, %v422
        %vm425 = vcmask 261120
        %v426 = vsel %vm425, %v423, 0.0
        %427 = vadd.xlane.f32.xlu0 %v426
        %v428 = vpop.xlane.xlu0 %427
        %v429 = vsel %vm425, %v424, 0.0
        %430 = vadd.xlane.f32.xlu0 %v429
        %v431 = vpop.xlane.xlu0 %430
        %s432 = smul.u32 %s26, 8
        %v433 = vlaneseq
        %v434 = vand.u32 %v433, 127
        %v435 = vstv %s432
        %v436 = vadd.s32 %v435, %v434
        %v437 = vld [vmem:[%s0] sm:$0x3]
        %438 = vset.pattern.permute.xlu0 0
        %439 = vperm.xlu0 %438, %v437
        %v440 = vpop.permute.xlu0 %439
        %vm441 = vcmp.lt.s32.totalorder %v436, %v440
        %v444 = vlaneseq
        %v445 = vshrl.u32 %v444, 7
        %v446 = vsub.s32 %v434, %v445
        %v447 = vrot.slane %v428, %v446
        %v448 = vlaneseq
        %v449 = vshrl.u32 %v448, 7
        %v450 = vsub.s32 %v434, %v449
        %v451 = vrot.slane %v431, %v450
        %vm452 = vcmask 1041409
        %v453 = vsel %vm452, %v451, %v447
        %v455 = vsel %vm441, %v453, 0.0
        %vm456 = vcmask 58368
        %v457 = vsel %vm456, %v455, 0.0
        %458 = vadd.xlane.f32.xlu0 %v457
        %v459 = vpop.xlane.xlu0 %458
        %v460 = vrot.slane %v459, 4
        %v461 = vadd.f32 %v459, %v460
        %v462 = vrot.slane %v461, 2
        %v463 = vadd.f32 %v461, %v462
        %v464 = vrot.slane %v463, 1
        %v465 = vadd.f32 %v463, %v464
        %s466 = vtos %v465
        %v467 = vstv %s466
        %vm468 = vcmask 7168
        %469 = vst.msk [vmem:[%s404] sm:$0xff] %vm468, %v467
        %470 = vst.msk [vmem:[%s408] sm:$0xff] %vm468, 0.0
        %p471 = scmp.eq.s32.totalorder %s26, 0
        // Predicated region
        $region61: #{feed_forward_transformer_loss.1} parent=47 // pred_check
          %p472 = pneg %p471
        $region62: #{feed_forward_transformer_loss.1} parent=47 // pred_check_branch
          %474 = sbr.rel (%p472) target = $region64
        $region63: #{feed_forward_transformer_loss.1} parent=47 // pred_region
          %v475 = vld [vmem:[%s2] sm:$0x3]
          %v476 = vld [vmem:[%s3] sm:$0x3]
          %v477 = vld [vmem:[%s1] sm:$0x3]
          %478 = vset.pattern.permute.xlu0 0
          %479 = vperm.xlu0 %478, %v477
          %v480 = vpop.permute.xlu0 %479
          %vm481 = vcmp.lt.s32.totalorder %v434, %v480
          %v482 = vadd.f32 %v476, 1.0
          %v483 = vlog2.pop %v482
          %v484 = vmul.f32 %v483, 0.6931472
          %v485 = vsub.f32 %v475, %v484
          %v486 = vmul.f32 %v485, %v485
          %v487 = vsel %vm481, %v486, 0.0
          %v488 = vsel %vm456, %v487, 0.0
          %489 = vadd.xlane.f32.xlu0 %v488
          %v490 = vpop.xlane.xlu0 %489
          %v491 = vrot.slane %v490, 4
          %v492 = vadd.f32 %v490, %v491
          %v493 = vrot.slane %v492, 2
          %v494 = vadd.f32 %v492, %v493
          %v495 = vrot.slane %v494, 1
          %v496 = vadd.f32 %v494, %v495
          %s497 = vtos %v496
          %v498 = vstv %s497
          %499 = vst.msk [vmem:[%s408] sm:$0xff] %vm468, %v498
        $region64: #{feed_forward_transformer_loss.1} parent=47 // pred_fallthru
          _
        %p500 = scmp.lt.s32.totalorder %s26, 1
        %s501 = scalar_select %p500, %s26, 1
        %s502 = smul.addr %s501, 8
        %s503 = scalar_lea.vmem %s7, %s502
        %p504 = scmp.lt.s32.totalorder %s26, 1
        %s505 = scalar_select %p504, %s26, 1
        %s506 = smul.addr %s505, 8
        %s507 = scalar_lea.vmem %s8, %s506
        // Predicated region
        $region65: #{feed_forward_transformer_loss.1} parent=47 // pred_check
          %p508 = pneg %p206
        $region66: #{feed_forward_transformer_loss.1} parent=47 // pred_check_branch
          %510 = sbr.rel (%p508) target = $region68
        $region67: #{feed_forward_transformer_loss.1} parent=47 // pred_region
          _
        $region68: #{feed_forward_transformer_loss.1} parent=47 // pred_fallthru
          _
        // Predicated region
        $region69: #{feed_forward_transformer_loss.1} parent=47 // pred_check
          %p511 = pneg %p232
        $region70: #{feed_forward_transformer_loss.1} parent=47 // pred_check_branch
          %513 = sbr.rel (%p511) target = $region72
        $region71: #{feed_forward_transformer_loss.1} parent=47 // pred_region
          _
        $region72: #{feed_forward_transformer_loss.1} parent=47 // pred_fallthru
          _
      $region48: #{feed_forward_transformer_loss.1} parent=5 // pred_fallthru
        _
      %p514 = scmp.le.s32.totalorder 2, %s21
      // Predicated region
      $region73: #{feed_forward_transformer_loss.1} parent=5 // pred_check
        %p515 = pneg %p514
      $region74: #{feed_forward_transformer_loss.1} parent=5 // pred_check_branch
        %517 = sbr.rel (%p515) target = $region76
      $region75: #{feed_forward_transformer_loss.1} parent=5 // pred_region
        %s518 = ssub.s32 %s21, 2
        // Predicated region
        $region77: #{feed_forward_transformer_loss.1} parent=75 // pred_check
          %p519 = pneg %p212
        $region78: #{feed_forward_transformer_loss.1} parent=75 // pred_check_branch
          %521 = sbr.rel (%p519) target = $region80
        $region79: #{feed_forward_transformer_loss.1} parent=75 // pred_region
          %p522 = scmp.lt.s32.totalorder %s27, 1
          %s523 = scalar_select %p522, %s27, 1
          %s524 = smul.addr %s523, 8
          %s525 = scalar_lea.vmem %s7, %s524
        $region80: #{feed_forward_transformer_loss.1} parent=75 // pred_fallthru
          _
        // Predicated region
        $region81: #{feed_forward_transformer_loss.1} parent=75 // pred_check
          %p526 = pneg %p238
        $region82: #{feed_forward_transformer_loss.1} parent=75 // pred_check_branch
          %528 = sbr.rel (%p526) target = $region84
        $region83: #{feed_forward_transformer_loss.1} parent=75 // pred_region
          %p529 = scmp.lt.s32.totalorder %s27, 1
          %s530 = scalar_select %p529, %s27, 1
          %s531 = smul.addr %s530, 8
          %s532 = scalar_lea.vmem %s8, %s531
        $region84: #{feed_forward_transformer_loss.1} parent=75 // pred_fallthru
          _
      $region76: #{feed_forward_transformer_loss.1} parent=5 // pred_fallthru
        _
    $region6: #{feed_forward_transformer_loss.1} parent=1 // loop_footer
      %s25 = sadd.s32 1, %s21
    $region7: #{feed_forward_transformer_loss.1} parent=1 // loop_footer_branch
      %20 = sbr.rel target = $region3
    $region8: #{feed_forward_transformer_loss.1} parent=1 // loop_exit
      _
    %533 = vsyncpa [#allocation3], 1
    %s534 = scalar_lea.sflag [#allocation3], 1
    %535 = vsyncpa %s534, 1
    %536 = vsyncpa [#allocation5], 1
    %s537 = scalar_lea.sflag [#allocation5], 1
    %538 = vsyncpa %s537, 1

</llo_original>
